<compile_context>
chip_gen: v5e
topology: v5e:2x2
jax: 0.10.0
libtpu: 0.0.40
codegen_flags: <defaults>
</compile_context>

<pallas_src>
import functools

import jax
import jax.numpy as jnp
from jax.experimental import pallas as pl
from jax.experimental.pallas import tpu as pltpu


def _round_up(x, m):
    return -(-x // m) * m


# --------------------------------------------------------------------------- kernel
def _mlm_head_kernel(*refs, eps, add_bias):
    if add_bias:
        (x_ref, w1_ref, b1_ref, gamma_ref, beta_ref,
         w2_ref, b2_ref, o_ref, h_scratch) = refs
    else:
        (x_ref, w1_ref, b1_ref, gamma_ref, beta_ref,
         w2_ref, o_ref, h_scratch) = refs
        b2_ref = None

    # ---- transform: dense -> act -> LayerNorm, computed once per row tile (j == 0),
    #      cached in VMEM scratch and reused for the remaining vocab tiles. ----
    @pl.when(pl.program_id(1) == 0)
    def _():
        x = x_ref[...].astype(h_scratch.dtype)                 # in-kernel cast (bf16)
        h = jnp.dot(x, w1_ref[...], preferred_element_type=jnp.float32)
        h = h + b1_ref[...].astype(jnp.float32)
        h = jnp.maximum(h, 0.0)                                # ACT2FN["relu"]

        mean = jnp.mean(h, axis=-1, keepdims=True)
        var = jnp.mean(jnp.square(h - mean), axis=-1, keepdims=True)
        h = (h - mean) * jax.lax.rsqrt(var + eps)
        h = h * gamma_ref[...].astype(jnp.float32) + beta_ref[...].astype(jnp.float32)
        h_scratch[...] = h.astype(h_scratch.dtype)

    # ---- decoder: Linear(H, V) over one vocab tile ----
    scores = jnp.dot(h_scratch[...], w2_ref[...], preferred_element_type=jnp.float32)
    if add_bias:
        scores = scores + b2_ref[...].astype(jnp.float32)
    o_ref[...] = scores.astype(o_ref.dtype)


# --------------------------------------------------------------------------- tiling
def _pick_tile(total, pref, align, small_align):
    """Return (tile, padded_total).

    Small problems (total <= pref) get a single tile rounded up to `small_align`.
    Otherwise search `align`-multiples in [pref/2, pref] and pick the one with the
    least zero-padding (largest tile wins ties)."""
    if total <= pref:
        t = _round_up(max(total, small_align), small_align)
        return t, t
    lo = max(align, (pref // 2 // align) * align)
    best_t, best_pad = None, None
    t = (pref // align) * align
    while t >= lo:
        pad = _round_up(total, t) - total
        if best_pad is None or pad < best_pad:
            best_t, best_pad = t, pad
            if pad == 0:
                break
        t -= align
    return best_t, _round_up(total, best_t)


def _buffered_spec(shape, index_map, buffers):
    """BlockSpec with an explicit pipeline buffer count; graceful fallback if this
    JAX version's BlockSpec lacks the pipeline_mode kwarg."""
    if buffers is None:
        return pl.BlockSpec(shape, index_map)
    try:
        return pl.BlockSpec(shape, index_map, pipeline_mode=pl.Buffered(buffers))
    except TypeError:
        return pl.BlockSpec(shape, index_map)


# --------------------------------------------------------------------------- params
def prepare_params(params, compute_dtype=jnp.bfloat16):
    """Cast parameters ONCE at load time (avoids a per-call HBM cast pass over the
    H x V decoder weight) and normalize vector shapes to (1, H) / (1, V)."""
    def _w(x):
        x = jnp.asarray(x)
        return x if x.dtype == compute_dtype else x.astype(compute_dtype)

    def _v(x):
        x = jnp.asarray(x).reshape(1, -1)
        return x if x.dtype == jnp.float32 else x.astype(jnp.float32)

    return {
        "dense_w": _w(params["dense_w"]),
        "dense_b": _v(params["dense_b"]),
        "ln_gamma": _v(params["ln_gamma"]),
        "ln_beta": _v(params["ln_beta"]),
        "decoder_w": _w(params["decoder_w"]),
        "decoder_b": _v(params["decoder_b"]),
    }


# --------------------------------------------------------------------------- wrapper
def t5_encoder_mlm_head(sequence_output, params, *, eps=1e-6,
                        tm=512, tv=1024,
                        compute_dtype=jnp.bfloat16,
                        out_dtype=jnp.bfloat16,
                        add_decoder_bias=True,
                        w2_buffers=2):
    """sequence_output: (B, S, H).  Returns logits (B, S, V) in out_dtype.

    tm can be raised to 1024 on v6e/v7x when M is large; w2_buffers=3 can help
    bandwidth-starved v5e if profiling shows exposed decoder-weight DMA.
    """
    B, S, H = sequence_output.shape
    V = params["decoder_w"].shape[1]
    M = B * S

    c_sz = jnp.dtype(compute_dtype).itemsize
    o_sz = jnp.dtype(out_dtype).itemsize
    x_sz = jnp.dtype(sequence_output.dtype).itemsize

    # Generation-aware VMEM budget (v7x has only 64 MiB per TensorCore).
    try:
        vmem_cap = int(pltpu.get_tpu_info().vmem_capacity_bytes)
    except Exception:
        vmem_cap = 128 << 20
    vmem_ceiling = max(32 << 20, vmem_cap - (16 << 20))

    def footprint(tm_, tv_):
        return (2 * tm_ * H * x_sz                 # x tiles (double-buffered)
                + H * H * c_sz + 3 * H * 4         # dense W + b1/gamma/beta (1 buffer)
                + max(w2_buffers, 2) * H * tv_ * c_sz  # decoder W tiles
                + 2 * tv_ * 4                      # decoder bias tiles
                + 2 * tm_ * tv_ * o_sz             # output tiles
                + tm_ * H * c_sz)                  # cached h_norm scratch

    tm, Mp = _pick_tile(M, tm, align=256, small_align=16)
    tv, Vp = _pick_tile(V, tv, align=128, small_align=128)
    # Shrink tiles (vocab first, then rows) if the footprint exceeds the VMEM budget.
    while footprint(tm, tv) > vmem_ceiling and tv > 512:
        tv, Vp = _pick_tile(V, max(tv // 2, 512), align=128, small_align=128)
    while footprint(tm, tv) > vmem_ceiling and tm > 256:
        tm, Mp = _pick_tile(M, max(tm // 2, 256), align=256, small_align=16)
    assert Mp % tm == 0 and Vp % tv == 0

    def _as(x, dt):
        x = jnp.asarray(x)
        return x if x.dtype == dt else x.astype(dt)

    # Weights expected pre-cast via prepare_params(); casts below are no-ops then.
    w1 = _as(params["dense_w"], compute_dtype)
    w2 = _as(params["decoder_w"], compute_dtype)
    b1 = _as(jnp.asarray(params["dense_b"]).reshape(1, -1), jnp.float32)
    gamma = _as(jnp.asarray(params["ln_gamma"]).reshape(1, -1), jnp.float32)
    beta = _as(jnp.asarray(params["ln_beta"]).reshape(1, -1), jnp.float32)
    b2 = _as(jnp.asarray(params["decoder_b"]).reshape(1, -1), jnp.float32)

    # x stays in its native dtype (cast to bf16 happens in-kernel under j == 0).
    x2d = sequence_output.reshape(M, H)
    if Mp > M:
        x2d = jnp.pad(x2d, ((0, Mp - M), (0, 0)))
    if Vp > V:
        w2 = jnp.pad(w2, ((0, 0), (0, Vp - V)))
        b2 = jnp.pad(b2, ((0, 0), (0, Vp - V)))

    in_specs = [
        pl.BlockSpec((tm, H), lambda i, j: (i, 0)),            # x row tile
        _buffered_spec((H, H), lambda i, j: (0, 0), 1),        # dense W (constant)
        _buffered_spec((1, H), lambda i, j: (0, 0), 1),        # dense bias
        _buffered_spec((1, H), lambda i, j: (0, 0), 1),        # LN gamma
        _buffered_spec((1, H), lambda i, j: (0, 0), 1),        # LN beta
        _buffered_spec((H, tv), lambda i, j: (0, j),
                       None if w2_buffers == 2 else w2_buffers),  # decoder W tile
    ]
    args = [x2d, w1, b1, gamma, beta, w2]
    if add_decoder_bias:
        in_specs.append(pl.BlockSpec((1, tv), lambda i, j: (0, j)))  # decoder bias tile
        args.append(b2)

    grid_rows = Mp // tm
    cost = pl.CostEstimate(
        flops=2 * Mp * H * H + 2 * Mp * H * Vp,
        transcendentals=Mp,  # one rsqrt per row
        bytes_accessed=(Mp * H * x_sz                     # activations in
                        + H * H * c_sz + 3 * H * 4        # resident dense W / vectors
                        + grid_rows * H * Vp * c_sz       # decoder W re-streamed per row tile
                        + grid_rows * Vp * 4              # decoder bias per row tile
                        + Mp * Vp * o_sz),                # logits out
    )

    vmem_limit = min(int(footprint(tm, tv) * 1.25) + (4 << 20), vmem_ceiling)

    kernel = functools.partial(_mlm_head_kernel, eps=eps, add_bias=add_decoder_bias)

    out2d = pl.pallas_call(
        kernel,
        out_shape=jax.ShapeDtypeStruct((Mp, Vp), out_dtype),
        grid_spec=pltpu.PrefetchScalarGridSpec(
            num_scalar_prefetch=0,
            grid=(Mp // tm, Vp // tv),
            in_specs=in_specs,
            out_specs=pl.BlockSpec((tm, tv), lambda i, j: (i, j)),
            scratch_shapes=[pltpu.VMEM((tm, H), compute_dtype)],
        ),
        compiler_params=pltpu.CompilerParams(
            # rows parallel (megacore); vocab axis MUST stay sequential ("arbitrary")
            # so the j==0 gate on the cached h_norm scratch is valid.
            dimension_semantics=("parallel", "arbitrary"),
            vmem_limit_bytes=vmem_limit,
        ),
        cost_estimate=cost,
    )(*args)

    if Mp > M or Vp > V:
        out2d = out2d[:M, :V]
    return out2d.reshape(B, S, V)


# --------------------------------------------------------------------------- reference
def _reference(sequence_output, params, eps=1e-6, compute_dtype=jnp.bfloat16):
    """Pure-JAX reference mirroring the kernel numerics (bf16 matmul operands,
    f32 accumulation, f32 LayerNorm statistics)."""
    x = sequence_output.astype(compute_dtype)
    w1 = params["dense_w"].astype(compute_dtype)
    h = jnp.dot(x, w1, preferred_element_type=jnp.float32) + params["dense_b"].astype(jnp.float32)
    h = jnp.maximum(h, 0.0)
    mean = jnp.mean(h, axis=-1, keepdims=True)
    var = jnp.mean((h - mean) ** 2, axis=-1, keepdims=True)
    h = (h - mean) * jax.lax.rsqrt(var + eps)
    h = h * params["ln_gamma"].astype(jnp.float32) + params["ln_beta"].astype(jnp.float32)
    w2 = params["decoder_w"].astype(compute_dtype)
    return (jnp.dot(h.astype(compute_dtype), w2, preferred_element_type=jnp.float32)
            + params["decoder_b"].astype(jnp.float32))


def _init_params(key, hidden_size, vocab_size):
    k1, k2, k3 = jax.random.split(key, 3)
    bound1 = 1.0 / jnp.sqrt(hidden_size)
    return {
        # PyTorch Linear weight is (out, in); we store pre-transposed (in, out).
        "dense_w": jax.random.uniform(k1, (hidden_size, hidden_size),
                                      jnp.float32, -bound1, bound1),
        "dense_b": jax.random.uniform(k2, (1, hidden_size),
                                      jnp.float32, -bound1, bound1),
        # nn.LayerNorm init: weight = 1, bias = 0
        "ln_gamma": jnp.ones((1, hidden_size), jnp.float32),
        "ln_beta": jnp.zeros((1, hidden_size), jnp.float32),
        # decoder: Linear(hidden, vocab, bias=False)
        "decoder_w": jax.random.uniform(k3, (hidden_size, vocab_size),
                                        jnp.float32, -bound1, bound1),
        # self.bias = nn.Parameter(torch.zeros(vocab_size)), tied to decoder.bias
        "decoder_b": jnp.zeros((1, vocab_size), jnp.float32),
    }


if __name__ == "__main__":
    B, S, H, V = 2, 8, 32, 256
    key = jax.random.PRNGKey(0)
    k_x, k_p = jax.random.split(key)

    sequence_output = jax.random.normal(k_x, (B, S, H), jnp.float32)
    raw_params = _init_params(k_p, H, V)
    params = prepare_params(raw_params)       # one-time weight cast (bf16) / reshape

    ref = _reference(sequence_output, raw_params)

    # Default path: bf16 logits (halved writeback).
    logits_bf16 = t5_encoder_mlm_head(sequence_output, params)
    logits_bf16 = jax.block_until_ready(logits_bf16)
    assert logits_bf16.shape == (B, S, V)
    assert jnp.allclose(logits_bf16.astype(jnp.float32), ref, atol=3e-2, rtol=3e-2), \
        "bf16-logits mismatch vs reference"

    # Tighter check with f32 logits.
    logits_f32 = t5_encoder_mlm_head(sequence_output, params, out_dtype=jnp.float32)
    logits_f32 = jax.block_until_ready(logits_f32)
    assert jnp.allclose(logits_f32, ref, atol=2e-3, rtol=2e-3), \
        "f32-logits mismatch vs reference"

    print("KERNEL_OK")
</pallas_src>

<mosaic_0001>
module attributes {stable_mosaic.version = 11 : i64} {
  func.func @_mlm_head_kernel(%arg0: i32, %arg1: i32, %arg2: memref<16x32xf32, #tpu.memory_space<vmem>>, %arg3: memref<32x32xbf16, #tpu.memory_space<vmem>>, %arg4: memref<1x32xf32, #tpu.memory_space<vmem>>, %arg5: memref<1x32xf32, #tpu.memory_space<vmem>>, %arg6: memref<1x32xf32, #tpu.memory_space<vmem>>, %arg7: memref<32x256xbf16, #tpu.memory_space<vmem>>, %arg8: memref<1x256xf32, #tpu.memory_space<vmem>>, %arg9: memref<16x256xbf16, #tpu.memory_space<vmem>>, %arg10: memref<16x32xbf16, #tpu.memory_space<vmem>>) attributes {dimension_semantics = [#tpu.dimension_semantics<parallel>, #tpu.dimension_semantics<arbitrary>], iteration_bounds = array<i64: 1, 1>, scalar_prefetch = 0 : i64, scratch_operands = 1 : i64, tpu.core_type = #tpu.core_type<tc>, window_params = [{transform_indices = @transform_0, window_bounds = array<i64: 16, 32>}, {pipeline_mode = #tpu.pipeline_mode<synchronous>, transform_indices = @transform_1, window_bounds = array<i64: 32, 32>}, {pipeline_mode = #tpu.pipeline_mode<synchronous>, transform_indices = @transform_2, window_bounds = array<i64: 1, 32>}, {pipeline_mode = #tpu.pipeline_mode<synchronous>, transform_indices = @transform_3, window_bounds = array<i64: 1, 32>}, {pipeline_mode = #tpu.pipeline_mode<synchronous>, transform_indices = @transform_4, window_bounds = array<i64: 1, 32>}, {transform_indices = @transform_5, window_bounds = array<i64: 32, 256>}, {transform_indices = @transform_6, window_bounds = array<i64: 1, 256>}, {transform_indices = @transform_7, window_bounds = array<i64: 16, 256>}]} {
    %c0_i32 = arith.constant 0 : i32
    %0 = arith.cmpi eq, %arg1, %c0_i32 : i32
    %1 = arith.extui %0 : i1 to i32
    %c0_i32_0 = arith.constant 0 : i32
    %2 = arith.cmpi ne, %1, %c0_i32_0 : i32
    scf.if %2 {
      %c0_8 = arith.constant 0 : index
      %c0_9 = arith.constant 0 : index
      %11 = vector.load %arg2[%c0_8, %c0_9] : memref<16x32xf32, #tpu.memory_space<vmem>>, vector<16x32xf32>
      %12 = arith.truncf %11 : vector<16x32xf32> to vector<16x32xbf16>
      %c0_10 = arith.constant 0 : index
      %c0_11 = arith.constant 0 : index
      %13 = vector.load %arg3[%c0_10, %c0_11] : memref<32x32xbf16, #tpu.memory_space<vmem>>, vector<32x32xbf16>
      %cst_12 = arith.constant dense<0.000000e+00> : vector<16x32xf32>
      %14 = tpu.matmul %12, %13, %cst_12 {dimension_numbers = #tpu.dot_dimension_numbers<[1], [0], [0], [1], [0, 0, 1, 1], [], []>} : vector<16x32xbf16>, vector<32x32xbf16>, vector<16x32xf32> -> vector<16x32xf32>
      %c0_13 = arith.constant 0 : index
      %c0_14 = arith.constant 0 : index
      %15 = vector.load %arg4[%c0_13, %c0_14] : memref<1x32xf32, #tpu.memory_space<vmem>>, vector<1x32xf32>
      %16 = vector.broadcast %15 : vector<1x32xf32> to vector<16x32xf32>
      %17 = arith.addf %14, %16 : vector<16x32xf32>
      %cst_15 = arith.constant 0.000000e+00 : f32
      %18 = vector.broadcast %cst_15 : f32 to vector<16x32xf32>
      %19 = arith.maximumf %17, %18 : vector<16x32xf32>
      %cst_16 = arith.constant dense<0.000000e+00> : vector<16xf32>
      %20 = vector.multi_reduction <add>, %19, %cst_16 [1] : vector<16x32xf32> to vector<16xf32>
      %21 = vector.shape_cast %20 : vector<16xf32> to vector<16x1xf32>
      %cst_17 = arith.constant 3.200000e+01 : f32
      %22 = vector.broadcast %cst_17 : f32 to vector<16x1xf32>
      %23 = arith.divf %21, %22 : vector<16x1xf32>
      %24 = vector.broadcast %23 : vector<16x1xf32> to vector<16x32xf32>
      %25 = arith.subf %19, %24 : vector<16x32xf32>
      %26 = arith.mulf %25, %25 : vector<16x32xf32>
      %cst_18 = arith.constant dense<0.000000e+00> : vector<16xf32>
      %27 = vector.multi_reduction <add>, %26, %cst_18 [1] : vector<16x32xf32> to vector<16xf32>
      %28 = vector.shape_cast %27 : vector<16xf32> to vector<16x1xf32>
      %cst_19 = arith.constant 3.200000e+01 : f32
      %29 = vector.broadcast %cst_19 : f32 to vector<16x1xf32>
      %30 = arith.divf %28, %29 : vector<16x1xf32>
      %31 = vector.broadcast %23 : vector<16x1xf32> to vector<16x32xf32>
      %32 = arith.subf %19, %31 : vector<16x32xf32>
      %cst_20 = arith.constant 9.99999997E-7 : f32
      %33 = vector.broadcast %cst_20 : f32 to vector<16x1xf32>
      %34 = arith.addf %30, %33 : vector<16x1xf32>
      %35 = math.rsqrt %34 : vector<16x1xf32>
      %36 = vector.broadcast %35 : vector<16x1xf32> to vector<16x32xf32>
      %37 = arith.mulf %32, %36 : vector<16x32xf32>
      %c0_21 = arith.constant 0 : index
      %c0_22 = arith.constant 0 : index
      %38 = vector.load %arg5[%c0_21, %c0_22] : memref<1x32xf32, #tpu.memory_space<vmem>>, vector<1x32xf32>
      %39 = vector.broadcast %38 : vector<1x32xf32> to vector<16x32xf32>
      %40 = arith.mulf %37, %39 : vector<16x32xf32>
      %c0_23 = arith.constant 0 : index
      %c0_24 = arith.constant 0 : index
      %41 = vector.load %arg6[%c0_23, %c0_24] : memref<1x32xf32, #tpu.memory_space<vmem>>, vector<1x32xf32>
      %42 = vector.broadcast %41 : vector<1x32xf32> to vector<16x32xf32>
      %43 = arith.addf %40, %42 : vector<16x32xf32>
      %44 = arith.truncf %43 : vector<16x32xf32> to vector<16x32xbf16>
      %c0_25 = arith.constant 0 : index
      %c0_26 = arith.constant 0 : index
      %45 = vector.load %arg10[%c0_25, %c0_26] : memref<16x32xbf16, #tpu.memory_space<vmem>>, vector<16x32xbf16>
      tpu.vector_store %arg10[%c0_25, %c0_26], %44 {strides = array<i32>} : memref<16x32xbf16, #tpu.memory_space<vmem>>, vector<16x32xbf16>,
    } else {
    }
    %c0 = arith.constant 0 : index
    %c0_1 = arith.constant 0 : index
    %3 = vector.load %arg10[%c0, %c0_1] : memref<16x32xbf16, #tpu.memory_space<vmem>>, vector<16x32xbf16>
    %c0_2 = arith.constant 0 : index
    %c0_3 = arith.constant 0 : index
    %4 = vector.load %arg7[%c0_2, %c0_3] : memref<32x256xbf16, #tpu.memory_space<vmem>>, vector<32x256xbf16>
    %cst = arith.constant dense<0.000000e+00> : vector<16x256xf32>
    %5 = tpu.matmul %3, %4, %cst {dimension_numbers = #tpu.dot_dimension_numbers<[1], [0], [0], [1], [0, 0, 1, 1], [], []>} : vector<16x32xbf16>, vector<32x256xbf16>, vector<16x256xf32> -> vector<16x256xf32>
    %c0_4 = arith.constant 0 : index
    %c0_5 = arith.constant 0 : index
    %6 = vector.load %arg8[%c0_4, %c0_5] : memref<1x256xf32, #tpu.memory_space<vmem>>, vector<1x256xf32>
    %7 = vector.broadcast %6 : vector<1x256xf32> to vector<16x256xf32>
    %8 = arith.addf %5, %7 : vector<16x256xf32>
    %9 = arith.truncf %8 : vector<16x256xf32> to vector<16x256xbf16>
    %c0_6 = arith.constant 0 : index
    %c0_7 = arith.constant 0 : index
    %10 = vector.load %arg9[%c0_6, %c0_7] : memref<16x256xbf16, #tpu.memory_space<vmem>>, vector<16x256xbf16>
    tpu.vector_store %arg9[%c0_6, %c0_7], %9 {strides = array<i32>} : memref<16x256xbf16, #tpu.memory_space<vmem>>, vector<16x256xbf16>,
    return
  }
  func.func @transform_0(%arg0: i32, %arg1: i32) -> (i32, i32) {
    %c0_i32 = arith.constant 0 : i32
    %c0_i32_0 = arith.constant 0 : i32
    return %arg0, %c0_i32 : i32, i32
  }
  func.func @transform_1(%arg0: i32, %arg1: i32) -> (i32, i32) {
    %c0_i32 = arith.constant 0 : i32
    %c0_i32_0 = arith.constant 0 : i32
    %c0_i32_1 = arith.constant 0 : i32
    return %c0_i32, %c0_i32_0 : i32, i32
  }
  func.func @transform_2(%arg0: i32, %arg1: i32) -> (i32, i32) {
    %c0_i32 = arith.constant 0 : i32
    %c0_i32_0 = arith.constant 0 : i32
    %c0_i32_1 = arith.constant 0 : i32
    return %c0_i32, %c0_i32_0 : i32, i32
  }
  func.func @transform_3(%arg0: i32, %arg1: i32) -> (i32, i32) {
    %c0_i32 = arith.constant 0 : i32
    %c0_i32_0 = arith.constant 0 : i32
    %c0_i32_1 = arith.constant 0 : i32
    return %c0_i32, %c0_i32_0 : i32, i32
  }
  func.func @transform_4(%arg0: i32, %arg1: i32) -> (i32, i32) {
    %c0_i32 = arith.constant 0 : i32
    %c0_i32_0 = arith.constant 0 : i32
    %c0_i32_1 = arith.constant 0 : i32
    return %c0_i32, %c0_i32_0 : i32, i32
  }
  func.func @transform_5(%arg0: i32, %arg1: i32) -> (i32, i32) {
    %c0_i32 = arith.constant 0 : i32
    %c0_i32_0 = arith.constant 0 : i32
    return %c0_i32, %arg1 : i32, i32
  }
  func.func @transform_6(%arg0: i32, %arg1: i32) -> (i32, i32) {
    %c0_i32 = arith.constant 0 : i32
    %c0_i32_0 = arith.constant 0 : i32
    return %c0_i32, %arg1 : i32, i32
  }
  func.func @transform_7(%arg0: i32, %arg1: i32) -> (i32, i32) {
    %c0_i32 = arith.constant 0 : i32
    return %arg0, %arg1 : i32, i32
  }
}

</mosaic_0001>

<llo_original>
// kernel: tpu_custom_call.1
$region0: #{tpu_custom_call.1}
  #allocation0 [shape = 'u32[]', space=smem, size = 0x4, offset = 0x4, fixed_abs, tag = 'smem constant byte address 0x4 - core index']
  #allocation1 [shape = 'u32[72,128]{1,0:T(1,128)}', space=vmem, size = 0x9000, scoped, tag = 'internal scratch']
  #allocation2 [shape = 'bf16[16,32]{1,0:T(8,128)(2,1)}', space=vmem, size = 0x1000, scoped, tag = 'scratch operand']
  %s0 = inlined_call_operand.hbm [shape: f32[16,32], index: 0, kind: input, shape index: {}]
  %s1 = inlined_call_operand.hbm [shape: bf16[32,32], index: 1, kind: input, shape index: {}]
  %s2 = inlined_call_operand.vmem [shape: f32[1,32], index: 2, kind: input, shape index: {}]
  %s3 = inlined_call_operand.hbm [shape: f32[1,32], index: 3, kind: input, shape index: {}]
  %s4 = inlined_call_operand.hbm [shape: f32[1,32], index: 4, kind: input, shape index: {}]
  %s5 = inlined_call_operand.hbm [shape: bf16[32,256], index: 5, kind: input, shape index: {}]
  %s6 = inlined_call_operand.vmem [shape: f32[1,256], index: 6, kind: input, shape index: {}]
  %s7 = inlined_call_operand.hbm [shape: bf16[16,256], index: 7, kind: output, shape index: {}]
  %s8 = sld [smem:[#allocation0]]
  $region62: #{tpu_custom_call.1} parent=0
    _
  %s10 = ssub.s32 1, %s8
  %s11 = scalar_select 0, %s10, %s8
  $region1: #{tpu_custom_call.1} parent=0
    #allocation3 [shape = 'u8[8192]{0}', space=vmem, size = 0x2000, scoped, tag = 'input window, operand 0, single buffered']
    #allocation4 [shape = 's32[1]{0}', space=sflag, size = 0x4, scoped, tag = 'scoped memory for tpu_custom_call.1']
    #allocation5 [shape = 's32[1]{0}', space=sflag, size = 0x4, scoped, tag = 'scoped memory for tpu_custom_call.1']
    #allocation6 [shape = 'u8[8192]{0}', space=vmem, size = 0x2000, scoped, tag = 'input window, operand 1, single buffered']
    #allocation7 [shape = 's32[1]{0}', space=sflag, size = 0x4, scoped, tag = 'scoped memory for tpu_custom_call.1']
    #allocation8 [shape = 'u8[512]{0}', space=vmem, size = 0x400, scoped, tag = 'input window, operand 3, single buffered']
    #allocation9 [shape = 'u8[512]{0}', space=vmem, size = 0x400, scoped, tag = 'input window, operand 4, single buffered']
    #allocation10 [shape = 's32[1]{0}', space=sflag, size = 0x4, scoped, tag = 'scoped memory for tpu_custom_call.1']
    #allocation11 [shape = 'u8[16384]{0}', space=vmem, size = 0x4000, scoped, tag = 'input window, operand 5, single buffered']
    #allocation12 [shape = 'u8[8192]{0}', space=vmem, size = 0x2000, scoped, tag = 'output window, operand 0, single buffered']
    %12 = vsyncpa [#allocation4], 0
    %13 = vsyncpa [#allocation7], 0
    %14 = vsyncpa [#allocation10], 0
    %15 = vsyncpa [#allocation5], 0
    // Predicated region
    $region2: #{tpu_custom_call.1} parent=1 // pred_check
      _
    $region3: #{tpu_custom_call.1} parent=1 // pred_check_branch
      %17 = sbr.rel (0) target = $region5
    $region4: #{tpu_custom_call.1} parent=1 // pred_region
      %19 = vsyncadd [#allocation4], 0
      %s20 = sshll.u32 %s0, 4
      %s21 = int_to_ptr.hbm [resolvable:$true] %s20
      %s22 = sshll.u32 [#allocation3], 4
      %s23 = int_to_ptr.vmem [resolvable:$true] %s22
      %28 = dma.hbm_to_vmem [thread:$0]  %s21, 256, %s23, [#allocation4], 128, 128, 8
    $region5: #{tpu_custom_call.1} parent=1 // pred_fallthru
      _
    // Predicated region
    $region6: #{tpu_custom_call.1} parent=1 // pred_check
      _
    $region7: #{tpu_custom_call.1} parent=1 // pred_check_branch
      %30 = sbr.rel (0) target = $region9
    $region8: #{tpu_custom_call.1} parent=1 // pred_region
      %32 = vsyncadd [#allocation7], 0
      %s33 = sshll.u32 %s1, 4
      %s34 = int_to_ptr.hbm [resolvable:$true] %s33
      %s35 = sshll.u32 [#allocation6], 4
      %s36 = int_to_ptr.vmem [resolvable:$true] %s35
      %41 = dma.hbm_to_vmem [thread:$0]  %s34, 256, %s36, [#allocation7], 64, 64, 4
    $region9: #{tpu_custom_call.1} parent=1 // pred_fallthru
      _
    // Predicated region
    $region10: #{tpu_custom_call.1} parent=1 // pred_check
      _
    $region11: #{tpu_custom_call.1} parent=1 // pred_check_branch
      %43 = sbr.rel (0) target = $region13
    $region12: #{tpu_custom_call.1} parent=1 // pred_region
      _
    $region13: #{tpu_custom_call.1} parent=1 // pred_fallthru
      _
    // Predicated region
    $region14: #{tpu_custom_call.1} parent=1 // pred_check
      _
    $region15: #{tpu_custom_call.1} parent=1 // pred_check_branch
      %45 = sbr.rel (0) target = $region17
    $region16: #{tpu_custom_call.1} parent=1 // pred_region
      %47 = vsyncadd [#allocation7], 0
      %s49 = sshll.u32 %s3, 4
      %s50 = int_to_ptr.hbm [resolvable:$true] %s49
      %s51 = sshll.u32 [#allocation8], 4
      %s52 = int_to_ptr.vmem [resolvable:$true] %s51
      %54 = dma.hbm_to_vmem [thread:$0]  %s50, 16, %s52, [#allocation7]
    $region17: #{tpu_custom_call.1} parent=1 // pred_fallthru
      _
    // Predicated region
    $region18: #{tpu_custom_call.1} parent=1 // pred_check
      _
    $region19: #{tpu_custom_call.1} parent=1 // pred_check_branch
      %56 = sbr.rel (0) target = $region21
    $region20: #{tpu_custom_call.1} parent=1 // pred_region
      %58 = vsyncadd [#allocation10], 0
      %s60 = sshll.u32 %s4, 4
      %s61 = int_to_ptr.hbm [resolvable:$true] %s60
      %s62 = sshll.u32 [#allocation9], 4
      %s63 = int_to_ptr.vmem [resolvable:$true] %s62
      %65 = dma.hbm_to_vmem [thread:$0]  %s61, 16, %s63, [#allocation10]
    $region21: #{tpu_custom_call.1} parent=1 // pred_fallthru
      _
    // Predicated region
    $region22: #{tpu_custom_call.1} parent=1 // pred_check
      _
    $region23: #{tpu_custom_call.1} parent=1 // pred_check_branch
      %67 = sbr.rel (0) target = $region25
    $region24: #{tpu_custom_call.1} parent=1 // pred_region
      %69 = vsyncadd [#allocation10], 0
      %s70 = sshll.u32 %s5, 4
      %s71 = int_to_ptr.hbm [resolvable:$true] %s70
      %s72 = sshll.u32 [#allocation11], 4
      %s73 = int_to_ptr.vmem [resolvable:$true] %s72
      %78 = dma.hbm_to_vmem [thread:$0]  %s71, 512, %s73, [#allocation10], 128, 128, 8
    $region25: #{tpu_custom_call.1} parent=1 // pred_fallthru
      _
    // Predicated region
    $region26: #{tpu_custom_call.1} parent=1 // pred_check
      _
    $region27: #{tpu_custom_call.1} parent=1 // pred_check_branch
      %80 = sbr.rel (0) target = $region29
    $region28: #{tpu_custom_call.1} parent=1 // pred_region
      _
    $region29: #{tpu_custom_call.1} parent=1 // pred_fallthru
      _
    // Predicated region
    $region30: #{tpu_custom_call.1} parent=1 // pred_check
      _
    $region31: #{tpu_custom_call.1} parent=1 // pred_check_branch
      %82 = sbr.rel (0) target = $region33
    $region32: #{tpu_custom_call.1} parent=1 // pred_region
      %84 = dma.done [#allocation4], 256
    $region33: #{tpu_custom_call.1} parent=1 // pred_fallthru
      _
    // Predicated region
    $region34: #{tpu_custom_call.1} parent=1 // pred_check
      _
    $region35: #{tpu_custom_call.1} parent=1 // pred_check_branch
      %86 = sbr.rel (0) target = $region37
    $region36: #{tpu_custom_call.1} parent=1 // pred_region
      %88 = dma.done [#allocation7], 256
    $region37: #{tpu_custom_call.1} parent=1 // pred_fallthru
      _
    // Predicated region
    $region38: #{tpu_custom_call.1} parent=1 // pred_check
      _
    $region39: #{tpu_custom_call.1} parent=1 // pred_check_branch
      %90 = sbr.rel (0) target = $region41
    $region40: #{tpu_custom_call.1} parent=1 // pred_region
      %92 = dma.done [#allocation7], 16
    $region41: #{tpu_custom_call.1} parent=1 // pred_fallthru
      _
    // Predicated region
    $region42: #{tpu_custom_call.1} parent=1 // pred_check
      _
    $region43: #{tpu_custom_call.1} parent=1 // pred_check_branch
      %94 = sbr.rel (0) target = $region45
    $region44: #{tpu_custom_call.1} parent=1 // pred_region
      %96 = dma.done [#allocation10], 16
    $region45: #{tpu_custom_call.1} parent=1 // pred_fallthru
      _
    // Predicated region
    $region46: #{tpu_custom_call.1} parent=1 // pred_check
      _
    $region47: #{tpu_custom_call.1} parent=1 // pred_check_branch
      %98 = sbr.rel (0) target = $region49
    $region48: #{tpu_custom_call.1} parent=1 // pred_region
      %100 = dma.done [#allocation10], 512
    $region49: #{tpu_custom_call.1} parent=1 // pred_fallthru
      _
    %p102 = scmp.eq.s32.totalorder 0, 0
    // Predicated region
    $region50: #{tpu_custom_call.1} parent=1 // pred_check
      %p103 = pneg %p102
    $region51: #{tpu_custom_call.1} parent=1 // pred_check_branch
      %105 = sbr.rel (%p103) target = $region53
    $region52: #{tpu_custom_call.1} parent=1 // pred_region
      %v106 = vld [vmem:[#allocation3] sm:$0xff]
      %v107 = vld [vmem:[#allocation3 + $0x8] sm:$0xff]
      %v108 = vpack.c.bf16 %v107, %v106
      %v109 = vld [vmem:[#allocation6] sm:$0xf]
      %v110 = vld [vmem:[#allocation6 + $0x4] sm:$0xf]
      %v111 = vld [vmem:[#allocation6 + $0x8] sm:$0xf]
      %v112 = vld [vmem:[#allocation6 + $0xc] sm:$0xf]
      %v113 = vld [vmem:[%s2] sm:$0x1]
      %v115 = vperm.slane %v113, 0
      %v121 = vunpack.c.l.b16 %v109
      %v122 = vunpack.c.l.b16 %v110
      %v123 = vunpack.c.l.b16 %v111
      %v124 = vunpack.c.l.b16 %v112
      %v125 = vpack.c.b16 %v122, %v121
      %v126 = vpack.c.b16 %v124, %v123
      %vm129 = vcmask 261120
      %v131 = vsel %vm129, %v108, 0
      %133 = vmatpush.bf16.msra.mxu0 0
      %134 = vmatpush.bf16.msra.mxu0 0
      %135 = vmatpush.bf16.msra.mxu0 0
      %136 = vmatpush.bf16.msra.mxu0 0
      %137 = vmatpush.bf16.msra.mxu0 0
      %138 = vmatpush.bf16.msra.mxu0 0
      %139 = vmatpush.bf16.msra.mxu0 %v126
      %140 = vmatpush.bf16.msra.mxu0 %v125
      %141 = vmatmul.bf16.gmra.mxu0 %v131
      %v142 = vpop.f32.mrf.mxu0
      %v143 = vadd.f32 %v115, %v142
      %v144 = vpop.f32.mrf.mxu0
      %v145 = vadd.f32 %v115, %v144
      %146 = vdwg.mxu0
      %v147 = vmax.f32 %v143, 0.0
      %v148 = vmax.f32 %v145, 0.0
      %v149 = vsel %vm129, %v147, 0.0
      %150 = vadd.xlane.f32.xlu0 %v149
      %v151 = vpop.xlane.xlu0 %150
      %v152 = vsel %vm129, %v148, 0.0
      %153 = vadd.xlane.f32.xlu0 %v152
      %v154 = vpop.xlane.xlu0 %153
      %v155 = vrcp.pop 32.0
      %v156 = vmul.f32 32.0, %v155
      %v157 = vsub.f32 1.0, %v156
      %v158 = vmul.f32 %v155, %v157
      %v159 = vadd.f32 %v155, %v158
      %vm160 = vweird.f32 %v155
      %v161 = vsel %vm160, %v155, %v159
      %v162 = vmul.f32 %v151, %v161
      %v163 = vmul.f32 %v154, %v161
      %v164 = vsub.f32 %v147, %v162
      %v165 = vsub.f32 %v148, %v163
      %v166 = vmul.f32 %v164, %v164
      %v167 = vmul.f32 %v165, %v165
      %v168 = vsel %vm129, %v166, 0.0
      %169 = vadd.xlane.f32.xlu0 %v168
      %v170 = vpop.xlane.xlu0 %169
      %v171 = vsel %vm129, %v167, 0.0
      %172 = vadd.xlane.f32.xlu0 %v171
      %v173 = vpop.xlane.xlu0 %172
      %v174 = vmul.f32 %v170, %v161
      %v175 = vmul.f32 %v173, %v161
      %v176 = vadd.f32 %v174, 1e-06
      %v177 = vadd.f32 %v175, 1e-06
      %v178 = vrsqrt.pop %v176
      %v179 = vmul.f32 %v178, %v176
      %v180 = vmul.f32 %v179, %v178
      %v181 = vmul.f32 0.5, %v180
      %v182 = vsub.f32 1.5, %v181
      %v183 = vmul.f32 %v178, %v182
      %vm184 = vweird.f32 %v176
      %vm185 = vweird.f32 %v178
      %vm186 = vmor %vm184, %vm185
      %v187 = vsel %vm186, %v178, %v183
      %v188 = vrsqrt.pop %v177
      %v189 = vmul.f32 %v188, %v177
      %v190 = vmul.f32 %v189, %v188
      %v191 = vmul.f32 0.5, %v190
      %v192 = vsub.f32 1.5, %v191
      %v193 = vmul.f32 %v188, %v192
      %vm194 = vweird.f32 %v177
      %vm195 = vweird.f32 %v188
      %vm196 = vmor %vm194, %vm195
      %v197 = vsel %vm196, %v188, %v193
      %v198 = vmul.f32 %v164, %v187
      %v199 = vmul.f32 %v165, %v197
      %v200 = vld [vmem:[#allocation8] sm:$0x1]
      %v202 = vperm.slane %v200, 0
      %v204 = vmul.f32 %v198, %v202
      %v205 = vmul.f32 %v199, %v202
      %v206 = vld [vmem:[#allocation9] sm:$0x1]
      %v208 = vperm.slane %v206, 0
      %v210 = vadd.f32 %v204, %v208
      %v211 = vadd.f32 %v205, %v208
      %v212 = vpack.c.bf16 %v210, %v210
      %v213 = vpack.c.bf16 %v211, %v211
      %vm214 = vcmask 257024
      %215 = vst.msk [vmem:[#allocation2] sm:$0xf] %vm214, %v212
      %216 = vst.msk [vmem:[#allocation2 + $0x4] sm:$0xf] %vm214, %v213
    $region53: #{tpu_custom_call.1} parent=1 // pred_fallthru
      _
    %v217 = vld [vmem:[#allocation2] sm:$0xf]
    %v218 = vld [vmem:[#allocation2 + $0x4] sm:$0xf]
    %v219 = vld [vmem:[#allocation11] sm:$0xff]
    %v220 = vld [vmem:[#allocation11 + $0x8] sm:$0xff]
    %v221 = vld [vmem:[#allocation11 + $0x10] sm:$0xff]
    %v222 = vld [vmem:[#allocation11 + $0x18] sm:$0xff]
    %v223 = vld [vmem:[%s6] sm:$0x3]
    %v225 = vperm.slane %v223, 0
    %v226 = vperm.slane %v223, 1
    %v231 = vunpack.c.l.b16 %v217
    %v232 = vunpack.c.l.b16 %v218
    %v233 = vpack.c.b16 %v232, %v231
    %v238 = vunpack.c.l.b16 %v219
    %v239 = vunpack.c.h.b16 %v219
    %v240 = vunpack.c.l.b16 %v220
    %v241 = vunpack.c.h.b16 %v220
    %v242 = vunpack.c.l.b16 %v221
    %v243 = vunpack.c.h.b16 %v221
    %v244 = vunpack.c.l.b16 %v222
    %v245 = vunpack.c.h.b16 %v222
    %v246 = vpack.c.b16 %v240, %v238
    %v247 = vpack.c.b16 %v241, %v239
    %v248 = vpack.c.b16 %v244, %v242
    %v249 = vpack.c.b16 %v245, %v243
    %vm254 = vcmask 261120
    %v256 = vsel %vm254, %v233, 0
    %258 = vmatpush.bf16.msra.mxu0 0
    %259 = vmatpush.bf16.msra.mxu0 0
    %260 = vmatpush.bf16.msra.mxu0 0
    %261 = vmatpush.bf16.msra.mxu0 0
    %262 = vmatpush.bf16.msra.mxu0 0
    %263 = vmatpush.bf16.msra.mxu0 0
    %264 = vmatpush.bf16.msra.mxu0 %v248
    %265 = vmatpush.bf16.msra.mxu0 %v246
    %266 = vmatmul.bf16.gmra.mxu0 %v256
    %v267 = vpop.f32.mrf.mxu0
    %v268 = vadd.f32 %v225, %v267
    %v269 = vpop.f32.mrf.mxu0
    %v270 = vadd.f32 %v225, %v269
    %271 = vdwg.mxu0
    %272 = vmatpush.bf16.msra.mxu0 0
    %273 = vmatpush.bf16.msra.mxu0 0
    %274 = vmatpush.bf16.msra.mxu0 0
    %275 = vmatpush.bf16.msra.mxu0 0
    %276 = vmatpush.bf16.msra.mxu0 0
    %277 = vmatpush.bf16.msra.mxu0 0
    %278 = vmatpush.bf16.msra.mxu0 %v249
    %279 = vmatpush.bf16.msra.mxu0 %v247
    %280 = vmatmul.bf16.gmra.mxu0 %v256
    %v281 = vpop.f32.mrf.mxu0
    %v282 = vadd.f32 %v226, %v281
    %v283 = vpop.f32.mrf.mxu0
    %v284 = vadd.f32 %v226, %v283
    %285 = vdwg.mxu0
    %v286 = vpack.c.bf16 %v282, %v268
    %v287 = vpack.c.bf16 %v284, %v270
    %288 = vst [vmem:[#allocation12] sm:$0xff] %v286
    %289 = vst [vmem:[#allocation12 + $0x8] sm:$0xff] %v287
    // Predicated region
    $region54: #{tpu_custom_call.1} parent=1 // pred_check
      _
    $region55: #{tpu_custom_call.1} parent=1 // pred_check_branch
      %291 = sbr.rel (0) target = $region57
    $region56: #{tpu_custom_call.1} parent=1 // pred_region
      %293 = vsyncadd [#allocation5], 0
      %s294 = sshll.u32 [#allocation12], 4
      %s295 = int_to_ptr.vmem [resolvable:$true] %s294
      %s296 = sshll.u32 %s7, 4
      %s297 = int_to_ptr.hbm [resolvable:$true] %s296
      %302 = dma.vmem_to_hbm [thread:$0]  %s295, 256, %s297, [#allocation5], 128, 128, 8
    $region57: #{tpu_custom_call.1} parent=1 // pred_fallthru
      _
    // Predicated region
    $region58: #{tpu_custom_call.1} parent=1 // pred_check
      _
    $region59: #{tpu_custom_call.1} parent=1 // pred_check_branch
      %304 = sbr.rel (0) target = $region61
    $region60: #{tpu_custom_call.1} parent=1 // pred_region
      %306 = dma.done [#allocation5], 256
    $region61: #{tpu_custom_call.1} parent=1 // pred_fallthru
      _
    %307 = vsyncpa [#allocation4], 1
    %308 = vsyncpa [#allocation7], 1
    %309 = vsyncpa [#allocation10], 1
    %310 = vsyncpa [#allocation5], 1

</llo_original>
